<compile_context>
chip_gen: v7x
topology: tpu7x:2x2x1
jax: 0.10.0
libtpu: 0.0.40
codegen_flags: <defaults>
</compile_context>

<pallas_src>
import jax
import jax.numpy as jnp
from jax import lax
from jax.experimental import pallas as pl
from jax.experimental.pallas import tpu as pltpu

EMBEDDING_DIM = 16
HIDDEN_DIM = 32
NUM_CLASSES = 11
VOCAB_SIZE = 26 + 1        # len(string.ascii_lowercase) + 1

LANE = 128                 # pad logits to a lane-dense (unmasked) store
MAX_BATCH_BLOCK = 256      # batch rows per grid step for large B (multiple of 8)


def rnn_kernel(ids_ref, table_ref, wih_ref, whh_ref, bih_ref, bhh_ref,
               wfc_ref, bfc_ref, out_ref):
    """h_t = tanh(x_t W_ih + h_{t-1} W_hh + b_ih + b_hh);  out = h_T W_fc + b_fc."""
    ids = ids_ref[...]                       # [T, Bb] int32 token ids (time-major)
    table = table_ref[...]                   # [V, E]
    w_ih = wih_ref[...]                      # [E, H]
    w_hh = whh_ref[...]                      # [H, H]
    bias = bih_ref[...] + bhh_ref[...]       # [1, H]
    w_fc = wfc_ref[...]                      # [H, LANE]   (fc weight, zero-padded)
    b_fc = bfc_ref[...]                      # [1, LANE]   (fc bias,   zero-padded)

    T, Bb = ids.shape
    V = table.shape[0]

    # Fused embedding lookup + input projection + bias:
    #   row v of (table @ W_ih + (b_ih + b_hh)) == table[v] @ W_ih + b_ih + b_hh
    # (one-hot rows sum to exactly 1, so folding the bias into the table is exact).
    table_proj = jnp.dot(table, w_ih,
                         preferred_element_type=jnp.float32) + bias         # [V, H]

    # All T gathers/projections as ONE MXU matmul; independent of h, so it sits
    # fully off the recurrence's serialized dependence chain.
    iota_v = lax.broadcasted_iota(jnp.int32, (T, Bb, V), 2)
    onehot = (ids[:, :, None] == iota_v).astype(jnp.float32)                # [T, Bb, V]
    xw = jnp.dot(onehot.reshape(T * Bb, V), table_proj,
                 preferred_element_type=jnp.float32)                        # [T*Bb, H]

    # Recurrence, fully unrolled (T is small & static).  h0 == 0 -> step 0 needs
    # no h @ W_hh matmul.
    h = jnp.tanh(xw[0:Bb, :])                                               # [Bb, H]
    for t in range(1, T):
        h = jnp.tanh(xw[t * Bb:(t + 1) * Bb, :]
                     + jnp.dot(h, w_hh, preferred_element_type=jnp.float32))

    # Lane-dense (128-wide) unmasked store; wrapper slices the 11 real classes.
    out_ref[...] = (jnp.dot(h, w_fc, preferred_element_type=jnp.float32)
                    + b_fc).astype(out_ref.dtype)


def rnn_forward(x_ids, params):
    """x_ids: int32 [B, T] token ids.  Returns logits [B, NUM_CLASSES]."""
    B, T = x_ids.shape

    # Batch block: whole (8-padded) batch if small, else 256-row blocks.
    if B <= MAX_BATCH_BLOCK:
        b_pad = max(8, ((B + 7) // 8) * 8)
        block_b = b_pad
    else:
        block_b = MAX_BATCH_BLOCK
        b_pad = ((B + block_b - 1) // block_b) * block_b

    ids_t = x_ids.astype(jnp.int32).T                                       # [T, B]
    if b_pad != B:
        ids_t = jnp.pad(ids_t, ((0, 0), (0, b_pad - B)))                    # pad ids=0

    # Zero-pad fc weights/bias to 128 output lanes (padded logits are exactly 0).
    w_fc = jnp.pad(params["w_fc"], ((0, 0), (0, LANE - NUM_CLASSES)))
    b_fc = jnp.pad(params["b_fc"], ((0, 0), (0, LANE - NUM_CLASSES)))

    grid = (b_pad // block_b,)
    full = lambda shape: pl.BlockSpec(shape, lambda i: (0, 0))

    out = pl.pallas_call(
        rnn_kernel,
        out_shape=jax.ShapeDtypeStruct((b_pad, LANE), jnp.float32),
        grid=grid,
        in_specs=[
            pl.BlockSpec((T, block_b), lambda i: (0, i)),        # token ids [T, Bb]
            full((VOCAB_SIZE, EMBEDDING_DIM)),                   # embedding table
            full((EMBEDDING_DIM, HIDDEN_DIM)),                   # W_ih
            full((HIDDEN_DIM, HIDDEN_DIM)),                      # W_hh
            full((1, HIDDEN_DIM)),                               # b_ih
            full((1, HIDDEN_DIM)),                               # b_hh
            full((HIDDEN_DIM, LANE)),                            # W_fc (padded)
            full((1, LANE)),                                     # b_fc (padded)
        ],
        out_specs=pl.BlockSpec((block_b, LANE), lambda i: (i, 0)),
        compiler_params=pltpu.CompilerParams(
            dimension_semantics=("parallel",)),
    )(
        ids_t,
        params["embedding"],
        params["w_ih"],
        params["w_hh"],
        params["b_ih"],
        params["b_hh"],
        w_fc,
        b_fc,
    )
    return out[:B, :NUM_CLASSES]


def init_params(key):
    ks = jax.random.split(key, 7)
    u = lambda k, shape, scale: jax.random.uniform(
        k, shape, dtype=jnp.float32, minval=-scale, maxval=scale)
    s_rnn = 1.0 / (HIDDEN_DIM ** 0.5)
    s_fc = 1.0 / (HIDDEN_DIM ** 0.5)
    return {
        "embedding": jax.random.normal(ks[0], (VOCAB_SIZE, EMBEDDING_DIM),
                                       dtype=jnp.float32),
        "w_ih": u(ks[1], (EMBEDDING_DIM, HIDDEN_DIM), s_rnn),   # torch W_ih^T
        "w_hh": u(ks[2], (HIDDEN_DIM, HIDDEN_DIM), s_rnn),      # torch W_hh^T
        "b_ih": u(ks[3], (1, HIDDEN_DIM), s_rnn),
        "b_hh": u(ks[4], (1, HIDDEN_DIM), s_rnn),
        "w_fc": u(ks[5], (HIDDEN_DIM, NUM_CLASSES), s_fc),      # torch fc.weight^T
        "b_fc": u(ks[6], (1, NUM_CLASSES), s_fc),
    }


def reference_forward(x_ids, params):
    emb = jnp.take(params["embedding"], x_ids, axis=0)
    B, T, _ = emb.shape
    h = jnp.zeros((B, HIDDEN_DIM), jnp.float32)
    for t in range(T):
        h = jnp.tanh(emb[:, t, :] @ params["w_ih"] + h @ params["w_hh"]
                     + params["b_ih"] + params["b_hh"])
    return h @ params["w_fc"] + params["b_fc"]


if __name__ == "__main__":
    key = jax.random.PRNGKey(0)
    pkey, xkey = jax.random.split(key)
    params = init_params(pkey)

    B, T = 2, 8
    x_ids = jax.random.randint(xkey, (B, T), 0, VOCAB_SIZE, dtype=jnp.int32)

    out = jax.block_until_ready(rnn_forward(x_ids, params))
    ref = reference_forward(x_ids, params)

    assert out.shape == (B, NUM_CLASSES)
    assert jnp.allclose(out, ref, atol=1e-4, rtol=1e-4)

    print("KERNEL_OK")
</pallas_src>

<mosaic_0001>
module attributes {stable_mosaic.version = 11 : i64} {
  func.func @rnn_kernel(%arg0: i32, %arg1: memref<8x8xi32, #tpu.memory_space<vmem>>, %arg2: memref<27x16xf32, #tpu.memory_space<vmem>>, %arg3: memref<16x32xf32, #tpu.memory_space<vmem>>, %arg4: memref<32x32xf32, #tpu.memory_space<vmem>>, %arg5: memref<1x32xf32, #tpu.memory_space<vmem>>, %arg6: memref<1x32xf32, #tpu.memory_space<vmem>>, %arg7: memref<32x128xf32, #tpu.memory_space<vmem>>, %arg8: memref<1x128xf32, #tpu.memory_space<vmem>>, %arg9: memref<8x128xf32, #tpu.memory_space<vmem>>) attributes {dimension_semantics = [#tpu.dimension_semantics<parallel>], iteration_bounds = array<i64: 1>, scalar_prefetch = 0 : i64, scratch_operands = 0 : i64, tpu.core_type = #tpu.core_type<tc>, window_params = [{transform_indices = @transform_0, window_bounds = array<i64: 8, 8>}, {pipeline_mode = #tpu.pipeline_mode<synchronous>, transform_indices = @transform_1, window_bounds = array<i64: 27, 16>}, {pipeline_mode = #tpu.pipeline_mode<synchronous>, transform_indices = @transform_2, window_bounds = array<i64: 16, 32>}, {pipeline_mode = #tpu.pipeline_mode<synchronous>, transform_indices = @transform_3, window_bounds = array<i64: 32, 32>}, {pipeline_mode = #tpu.pipeline_mode<synchronous>, transform_indices = @transform_4, window_bounds = array<i64: 1, 32>}, {pipeline_mode = #tpu.pipeline_mode<synchronous>, transform_indices = @transform_5, window_bounds = array<i64: 1, 32>}, {pipeline_mode = #tpu.pipeline_mode<synchronous>, transform_indices = @transform_6, window_bounds = array<i64: 32, 128>}, {pipeline_mode = #tpu.pipeline_mode<synchronous>, transform_indices = @transform_7, window_bounds = array<i64: 1, 128>}, {transform_indices = @transform_8, window_bounds = array<i64: 8, 128>}]} {
    %c0 = arith.constant 0 : index
    %c0_0 = arith.constant 0 : index
    %0 = vector.load %arg1[%c0, %c0_0] : memref<8x8xi32, #tpu.memory_space<vmem>>, vector<8x8xi32>
    %c0_1 = arith.constant 0 : index
    %c0_2 = arith.constant 0 : index
    %1 = vector.load %arg2[%c0_1, %c0_2] : memref<27x16xf32, #tpu.memory_space<vmem>>, vector<27x16xf32>
    %c0_3 = arith.constant 0 : index
    %c0_4 = arith.constant 0 : index
    %2 = vector.load %arg3[%c0_3, %c0_4] : memref<16x32xf32, #tpu.memory_space<vmem>>, vector<16x32xf32>
    %c0_5 = arith.constant 0 : index
    %c0_6 = arith.constant 0 : index
    %3 = vector.load %arg4[%c0_5, %c0_6] : memref<32x32xf32, #tpu.memory_space<vmem>>, vector<32x32xf32>
    %c0_7 = arith.constant 0 : index
    %c0_8 = arith.constant 0 : index
    %4 = vector.load %arg5[%c0_7, %c0_8] : memref<1x32xf32, #tpu.memory_space<vmem>>, vector<1x32xf32>
    %c0_9 = arith.constant 0 : index
    %c0_10 = arith.constant 0 : index
    %5 = vector.load %arg6[%c0_9, %c0_10] : memref<1x32xf32, #tpu.memory_space<vmem>>, vector<1x32xf32>
    %6 = arith.addf %4, %5 : vector<1x32xf32>
    %c0_11 = arith.constant 0 : index
    %c0_12 = arith.constant 0 : index
    %7 = vector.load %arg7[%c0_11, %c0_12] : memref<32x128xf32, #tpu.memory_space<vmem>>, vector<32x128xf32>
    %c0_13 = arith.constant 0 : index
    %c0_14 = arith.constant 0 : index
    %8 = vector.load %arg8[%c0_13, %c0_14] : memref<1x128xf32, #tpu.memory_space<vmem>>, vector<1x128xf32>
    %cst = arith.constant dense<0.000000e+00> : vector<27x32xf32>
    %9 = tpu.matmul %1, %2, %cst {dimension_numbers = #tpu.dot_dimension_numbers<[1], [0], [0], [1], [0, 0, 1, 1], [], []>} : vector<27x16xf32>, vector<16x32xf32>, vector<27x32xf32> -> vector<27x32xf32>
    %10 = vector.broadcast %6 : vector<1x32xf32> to vector<27x32xf32>
    %11 = arith.addf %9, %10 : vector<27x32xf32>
    %12 = tpu.iota {dimensions = array<i32: 2>} : vector<8x8x27xi32>
    %13 = vector.shape_cast %0 : vector<8x8xi32> to vector<8x8x1xi32>
    %14 = vector.broadcast %13 : vector<8x8x1xi32> to vector<8x8x27xi32>
    %15 = arith.cmpi eq, %14, %12 : vector<8x8x27xi32>
    %16 = arith.extui %15 : vector<8x8x27xi1> to vector<8x8x27xi32>
    %17 = arith.sitofp %16 : vector<8x8x27xi32> to vector<8x8x27xf32>
    %18 = vector.shape_cast %17 : vector<8x8x27xf32> to vector<64x27xf32>
    %cst_15 = arith.constant dense<0.000000e+00> : vector<64x32xf32>
    %19 = tpu.matmul %18, %11, %cst_15 {dimension_numbers = #tpu.dot_dimension_numbers<[1], [0], [0], [1], [0, 0, 1, 1], [], []>} : vector<64x27xf32>, vector<27x32xf32>, vector<64x32xf32> -> vector<64x32xf32>
    %20 = vector.extract_strided_slice %19 {offsets = [0, 0], sizes = [8, 32], strides = [1, 1]} : vector<64x32xf32> to vector<8x32xf32>
    %21 = math.tanh %20 : vector<8x32xf32>
    %22 = vector.extract_strided_slice %19 {offsets = [8, 0], sizes = [8, 32], strides = [1, 1]} : vector<64x32xf32> to vector<8x32xf32>
    %cst_16 = arith.constant dense<0.000000e+00> : vector<8x32xf32>
    %23 = tpu.matmul %21, %3, %cst_16 {dimension_numbers = #tpu.dot_dimension_numbers<[1], [0], [0], [1], [0, 0, 1, 1], [], []>} : vector<8x32xf32>, vector<32x32xf32>, vector<8x32xf32> -> vector<8x32xf32>
    %24 = arith.addf %22, %23 : vector<8x32xf32>
    %25 = math.tanh %24 : vector<8x32xf32>
    %26 = vector.extract_strided_slice %19 {offsets = [16, 0], sizes = [8, 32], strides = [1, 1]} : vector<64x32xf32> to vector<8x32xf32>
    %cst_17 = arith.constant dense<0.000000e+00> : vector<8x32xf32>
    %27 = tpu.matmul %25, %3, %cst_17 {dimension_numbers = #tpu.dot_dimension_numbers<[1], [0], [0], [1], [0, 0, 1, 1], [], []>} : vector<8x32xf32>, vector<32x32xf32>, vector<8x32xf32> -> vector<8x32xf32>
    %28 = arith.addf %26, %27 : vector<8x32xf32>
    %29 = math.tanh %28 : vector<8x32xf32>
    %30 = vector.extract_strided_slice %19 {offsets = [24, 0], sizes = [8, 32], strides = [1, 1]} : vector<64x32xf32> to vector<8x32xf32>
    %cst_18 = arith.constant dense<0.000000e+00> : vector<8x32xf32>
    %31 = tpu.matmul %29, %3, %cst_18 {dimension_numbers = #tpu.dot_dimension_numbers<[1], [0], [0], [1], [0, 0, 1, 1], [], []>} : vector<8x32xf32>, vector<32x32xf32>, vector<8x32xf32> -> vector<8x32xf32>
    %32 = arith.addf %30, %31 : vector<8x32xf32>
    %33 = math.tanh %32 : vector<8x32xf32>
    %34 = vector.extract_strided_slice %19 {offsets = [32, 0], sizes = [8, 32], strides = [1, 1]} : vector<64x32xf32> to vector<8x32xf32>
    %cst_19 = arith.constant dense<0.000000e+00> : vector<8x32xf32>
    %35 = tpu.matmul %33, %3, %cst_19 {dimension_numbers = #tpu.dot_dimension_numbers<[1], [0], [0], [1], [0, 0, 1, 1], [], []>} : vector<8x32xf32>, vector<32x32xf32>, vector<8x32xf32> -> vector<8x32xf32>
    %36 = arith.addf %34, %35 : vector<8x32xf32>
    %37 = math.tanh %36 : vector<8x32xf32>
    %38 = vector.extract_strided_slice %19 {offsets = [40, 0], sizes = [8, 32], strides = [1, 1]} : vector<64x32xf32> to vector<8x32xf32>
    %cst_20 = arith.constant dense<0.000000e+00> : vector<8x32xf32>
    %39 = tpu.matmul %37, %3, %cst_20 {dimension_numbers = #tpu.dot_dimension_numbers<[1], [0], [0], [1], [0, 0, 1, 1], [], []>} : vector<8x32xf32>, vector<32x32xf32>, vector<8x32xf32> -> vector<8x32xf32>
    %40 = arith.addf %38, %39 : vector<8x32xf32>
    %41 = math.tanh %40 : vector<8x32xf32>
    %42 = vector.extract_strided_slice %19 {offsets = [48, 0], sizes = [8, 32], strides = [1, 1]} : vector<64x32xf32> to vector<8x32xf32>
    %cst_21 = arith.constant dense<0.000000e+00> : vector<8x32xf32>
    %43 = tpu.matmul %41, %3, %cst_21 {dimension_numbers = #tpu.dot_dimension_numbers<[1], [0], [0], [1], [0, 0, 1, 1], [], []>} : vector<8x32xf32>, vector<32x32xf32>, vector<8x32xf32> -> vector<8x32xf32>
    %44 = arith.addf %42, %43 : vector<8x32xf32>
    %45 = math.tanh %44 : vector<8x32xf32>
    %46 = vector.extract_strided_slice %19 {offsets = [56, 0], sizes = [8, 32], strides = [1, 1]} : vector<64x32xf32> to vector<8x32xf32>
    %cst_22 = arith.constant dense<0.000000e+00> : vector<8x32xf32>
    %47 = tpu.matmul %45, %3, %cst_22 {dimension_numbers = #tpu.dot_dimension_numbers<[1], [0], [0], [1], [0, 0, 1, 1], [], []>} : vector<8x32xf32>, vector<32x32xf32>, vector<8x32xf32> -> vector<8x32xf32>
    %48 = arith.addf %46, %47 : vector<8x32xf32>
    %49 = math.tanh %48 : vector<8x32xf32>
    %cst_23 = arith.constant dense<0.000000e+00> : vector<8x128xf32>
    %50 = tpu.matmul %49, %7, %cst_23 {dimension_numbers = #tpu.dot_dimension_numbers<[1], [0], [0], [1], [0, 0, 1, 1], [], []>} : vector<8x32xf32>, vector<32x128xf32>, vector<8x128xf32> -> vector<8x128xf32>
    %51 = vector.broadcast %8 : vector<1x128xf32> to vector<8x128xf32>
    %52 = arith.addf %50, %51 : vector<8x128xf32>
    %c0_24 = arith.constant 0 : index
    %c0_25 = arith.constant 0 : index
    %53 = vector.load %arg9[%c0_24, %c0_25] : memref<8x128xf32, #tpu.memory_space<vmem>>, vector<8x128xf32>
    tpu.vector_store %arg9[%c0_24, %c0_25], %52 {strides = array<i32>} : memref<8x128xf32, #tpu.memory_space<vmem>>, vector<8x128xf32>,
    return
  }
  func.func @transform_0(%arg0: i32) -> (i32, i32) {
    %c0_i32 = arith.constant 0 : i32
    %c0_i32_0 = arith.constant 0 : i32
    return %c0_i32, %arg0 : i32, i32
  }
  func.func @transform_1(%arg0: i32) -> (i32, i32) {
    %c0_i32 = arith.constant 0 : i32
    %c0_i32_0 = arith.constant 0 : i32
    %c0_i32_1 = arith.constant 0 : i32
    return %c0_i32, %c0_i32_0 : i32, i32
  }
  func.func @transform_2(%arg0: i32) -> (i32, i32) {
    %c0_i32 = arith.constant 0 : i32
    %c0_i32_0 = arith.constant 0 : i32
    %c0_i32_1 = arith.constant 0 : i32
    return %c0_i32, %c0_i32_0 : i32, i32
  }
  func.func @transform_3(%arg0: i32) -> (i32, i32) {
    %c0_i32 = arith.constant 0 : i32
    %c0_i32_0 = arith.constant 0 : i32
    %c0_i32_1 = arith.constant 0 : i32
    return %c0_i32, %c0_i32_0 : i32, i32
  }
  func.func @transform_4(%arg0: i32) -> (i32, i32) {
    %c0_i32 = arith.constant 0 : i32
    %c0_i32_0 = arith.constant 0 : i32
    %c0_i32_1 = arith.constant 0 : i32
    return %c0_i32, %c0_i32_0 : i32, i32
  }
  func.func @transform_5(%arg0: i32) -> (i32, i32) {
    %c0_i32 = arith.constant 0 : i32
    %c0_i32_0 = arith.constant 0 : i32
    %c0_i32_1 = arith.constant 0 : i32
    return %c0_i32, %c0_i32_0 : i32, i32
  }
  func.func @transform_6(%arg0: i32) -> (i32, i32) {
    %c0_i32 = arith.constant 0 : i32
    %c0_i32_0 = arith.constant 0 : i32
    %c0_i32_1 = arith.constant 0 : i32
    return %c0_i32, %c0_i32_0 : i32, i32
  }
  func.func @transform_7(%arg0: i32) -> (i32, i32) {
    %c0_i32 = arith.constant 0 : i32
    %c0_i32_0 = arith.constant 0 : i32
    %c0_i32_1 = arith.constant 0 : i32
    return %c0_i32, %c0_i32_0 : i32, i32
  }
  func.func @transform_8(%arg0: i32) -> (i32, i32) {
    %c0_i32 = arith.constant 0 : i32
    %c0_i32_0 = arith.constant 0 : i32
    return %arg0, %c0_i32 : i32, i32
  }
}

</mosaic_0001>

<llo_original>
// kernel: tpu_custom_call.1
$region0: #{tpu_custom_call.1}
  #allocation0 [shape = 'u32[]', space=smem, size = 0x4, offset = 0x4, fixed_abs, tag = 'smem constant byte address 0x4 - core index']
  #allocation1 [shape = 'u32[144,128]{1,0:T(1,128)}', space=vmem, size = 0x12000, scoped, tag = 'internal scratch']
  %s0 = inlined_call_operand.hbm [shape: s32[8,8], index: 0, kind: input, shape index: {}]
  %s1 = inlined_call_operand.vmem [shape: f32[27,16], index: 1, kind: input, shape index: {}]
  %s2 = inlined_call_operand.hbm [shape: f32[16,32], index: 2, kind: input, shape index: {}]
  %s3 = inlined_call_operand.vmem [shape: f32[32,32], index: 3, kind: input, shape index: {}]
  %s4 = inlined_call_operand.vmem [shape: f32[1,32], index: 4, kind: input, shape index: {}]
  %s5 = inlined_call_operand.vmem [shape: f32[1,32], index: 5, kind: input, shape index: {}]
  %s6 = inlined_call_operand.vmem [shape: f32[32,128], index: 6, kind: input, shape index: {}]
  %s7 = inlined_call_operand.vmem [shape: f32[1,128], index: 7, kind: input, shape index: {}]
  %s8 = inlined_call_operand.hbm [shape: f32[8,128], index: 8, kind: output, shape index: {}]
  %s9 = sld [smem:[#allocation0]]
  $region50: #{tpu_custom_call.1} parent=0
    _
  %s11 = ssub.s32 1, %s9
  %s12 = scalar_select 0, %s11, %s9
  $region1: #{tpu_custom_call.1} parent=0
    #allocation2 [shape = 'u8[4096]{0}', space=vmem, size = 0x1000, scoped, tag = 'input window, operand 0, single buffered']
    #allocation3 [shape = 's32[1]{0}', space=sflag, size = 0x4, scoped, tag = 'scoped memory for tpu_custom_call.1']
    #allocation4 [shape = 's32[1]{0}', space=sflag, size = 0x4, scoped, tag = 'scoped memory for tpu_custom_call.1']
    #allocation5 [shape = 'u8[8192]{0}', space=vmem, size = 0x2000, scoped, tag = 'input window, operand 2, single buffered']
    #allocation6 [shape = 's32[1]{0}', space=sflag, size = 0x4, scoped, tag = 'scoped memory for tpu_custom_call.1']
    #allocation7 [shape = 'u8[4096]{0}', space=vmem, size = 0x1000, scoped, tag = 'output window, operand 0, single buffered']
    %13 = vsyncpa [#allocation3], 0
    %14 = vsyncpa [#allocation6], 0
    %15 = vsyncpa [#allocation4], 0
    // Predicated region
    $region2: #{tpu_custom_call.1} parent=1 // pred_check
      _
    $region3: #{tpu_custom_call.1} parent=1 // pred_check_branch
      %17 = sbr.rel (0) target = $region5
    $region4: #{tpu_custom_call.1} parent=1 // pred_region
      %s19 = ssub.s32 128, 128
      %20 = vsyncadd [#allocation3], %s19
      %s22 = sshll.u32 [#allocation2], 4
      %s23 = int_to_ptr.vmem [resolvable:$true] %s22
      %25 = dma.hbm_to_vmem [thread:$0]  %s0, 128, %s23, [#allocation3]
    $region5: #{tpu_custom_call.1} parent=1 // pred_fallthru
      _
    // Predicated region
    $region6: #{tpu_custom_call.1} parent=1 // pred_check
      _
    $region7: #{tpu_custom_call.1} parent=1 // pred_check_branch
      %27 = sbr.rel (0) target = $region9
    $region8: #{tpu_custom_call.1} parent=1 // pred_region
      _
    $region9: #{tpu_custom_call.1} parent=1 // pred_fallthru
      _
    // Predicated region
    $region10: #{tpu_custom_call.1} parent=1 // pred_check
      _
    $region11: #{tpu_custom_call.1} parent=1 // pred_check_branch
      %29 = sbr.rel (0) target = $region13
    $region12: #{tpu_custom_call.1} parent=1 // pred_region
      %s31 = ssub.s32 256, 256
      %32 = vsyncadd [#allocation6], %s31
      %s33 = sshll.u32 [#allocation5], 4
      %s34 = int_to_ptr.vmem [resolvable:$true] %s33
      %39 = dma.hbm_to_vmem [thread:$0]  %s2, 256, %s34, [#allocation6], 128, 128, 8
    $region13: #{tpu_custom_call.1} parent=1 // pred_fallthru
      _
    // Predicated region
    $region14: #{tpu_custom_call.1} parent=1 // pred_check
      _
    $region15: #{tpu_custom_call.1} parent=1 // pred_check_branch
      %41 = sbr.rel (0) target = $region17
    $region16: #{tpu_custom_call.1} parent=1 // pred_region
      _
    $region17: #{tpu_custom_call.1} parent=1 // pred_fallthru
      _
    // Predicated region
    $region18: #{tpu_custom_call.1} parent=1 // pred_check
      _
    $region19: #{tpu_custom_call.1} parent=1 // pred_check_branch
      %43 = sbr.rel (0) target = $region21
    $region20: #{tpu_custom_call.1} parent=1 // pred_region
      _
    $region21: #{tpu_custom_call.1} parent=1 // pred_fallthru
      _
    // Predicated region
    $region22: #{tpu_custom_call.1} parent=1 // pred_check
      _
    $region23: #{tpu_custom_call.1} parent=1 // pred_check_branch
      %45 = sbr.rel (0) target = $region25
    $region24: #{tpu_custom_call.1} parent=1 // pred_region
      _
    $region25: #{tpu_custom_call.1} parent=1 // pred_fallthru
      _
    // Predicated region
    $region26: #{tpu_custom_call.1} parent=1 // pred_check
      _
    $region27: #{tpu_custom_call.1} parent=1 // pred_check_branch
      %47 = sbr.rel (0) target = $region29
    $region28: #{tpu_custom_call.1} parent=1 // pred_region
      _
    $region29: #{tpu_custom_call.1} parent=1 // pred_fallthru
      _
    // Predicated region
    $region30: #{tpu_custom_call.1} parent=1 // pred_check
      _
    $region31: #{tpu_custom_call.1} parent=1 // pred_check_branch
      %49 = sbr.rel (0) target = $region33
    $region32: #{tpu_custom_call.1} parent=1 // pred_region
      _
    $region33: #{tpu_custom_call.1} parent=1 // pred_fallthru
      _
    // Predicated region
    $region34: #{tpu_custom_call.1} parent=1 // pred_check
      _
    $region35: #{tpu_custom_call.1} parent=1 // pred_check_branch
      %51 = sbr.rel (0) target = $region37
    $region36: #{tpu_custom_call.1} parent=1 // pred_region
      %52 = dma.done [#allocation3], 128
    $region37: #{tpu_custom_call.1} parent=1 // pred_fallthru
      _
    // Predicated region
    $region38: #{tpu_custom_call.1} parent=1 // pred_check
      _
    $region39: #{tpu_custom_call.1} parent=1 // pred_check_branch
      %54 = sbr.rel (0) target = $region41
    $region40: #{tpu_custom_call.1} parent=1 // pred_region
      %55 = dma.done [#allocation6], 256
    $region41: #{tpu_custom_call.1} parent=1 // pred_fallthru
      _
    %v56 = vld [vmem:[#allocation2] sm:$0xff]
    %v57 = vld [vmem:[%s1] sm:$0xff]
    %v58 = vld [vmem:[%s1 + $0x8] sm:$0xff]
    %v59 = vld [vmem:[%s1 + $0x10] sm:$0xff]
    %v60 = vld [vmem:[%s1 + $0x18] sm:$0x7]
    %v61 = vld [vmem:[#allocation5] sm:$0xff]
    %v62 = vld [vmem:[#allocation5 + $0x8] sm:$0xff]
    %v63 = vld [vmem:[%s3] sm:$0xff]
    %v64 = vld [vmem:[%s3 + $0x8] sm:$0xff]
    %v65 = vld [vmem:[%s3 + $0x10] sm:$0xff]
    %v66 = vld [vmem:[%s3 + $0x18] sm:$0xff]
    %v67 = vld [vmem:[%s4] sm:$0x1]
    %v68 = vld [vmem:[%s5] sm:$0x1]
    %v69 = vadd.f32 %v67, %v68
    %v70 = vld [vmem:[%s6] sm:$0xff]
    %v71 = vld [vmem:[%s6 + $0x8] sm:$0xff]
    %v72 = vld [vmem:[%s6 + $0x10] sm:$0xff]
    %v73 = vld [vmem:[%s6 + $0x18] sm:$0xff]
    %v74 = vld [vmem:[%s7] sm:$0x1]
    %v76 = vlaneseq
    %v77 = vshrl.u32 %v76, 7
    %v78 = vsub.s32 0, %v77
    %v79 = vrot.slane %v69, %v78
    %vm81 = vcmask 130048
    %v83 = vsel %vm81, %v57, 0
    %v86 = vsel %vm81, %v58, 0
    %v89 = vsel %vm81, %v59, 0
    %v92 = vsel %vm81, %v60, 0
    %94 = vmatprep.subr.mxu0 0.0
    %95 = vmatpush1.msra.mxu0 %v61
    %96 = vmatprep.subr.mxu0 0.0
    %97 = vmatpush1.msra.mxu0 %v62
    %98 = vmatprep.subr.mxu0 0.0
    %99 = vmatpush1.msra.mxu0 0.0
    %100 = vmatprep.subr.mxu0 0.0
    %101 = vmatpush1.msra.mxu0 0.0
    %102 = vmatprep.subr.mxu0 0.0
    %103 = vmatpush1.msra.mxu0 0.0
    %104 = vmatprep.subr.mxu0 0.0
    %105 = vmatpush1.msra.mxu0 0.0
    %106 = vmatprep.subr.mxu0 0.0
    %107 = vmatpush1.msra.mxu0 0.0
    %108 = vmatprep.subr.mxu0 0.0
    %109 = vmatpush1.msra.mxu0 0.0
    %110 = vmatprep.subr.mxu0 0.0
    %111 = vmatpush1.msra.mxu0 0.0
    %112 = vmatprep.subr.mxu0 0.0
    %113 = vmatpush1.msra.mxu0 0.0
    %114 = vmatprep.subr.mxu0 0.0
    %115 = vmatpush1.msra.mxu0 0.0
    %116 = vmatprep.subr.mxu0 0.0
    %117 = vmatpush1.msra.mxu0 0.0
    %118 = vmatprep.subr.mxu0 0.0
    %119 = vmatpush1.msra.mxu0 0.0
    %120 = vmatprep.subr.mxu0 0.0
    %121 = vmatpush1.msra.mxu0 0.0
    %122 = vmatprep.subr.mxu0 0.0
    %123 = vmatpush1.msra.mxu0 0.0
    %124 = vmatprep.subr.mxu0 0.0
    %125 = vmatpush1.msra.mxu0 0.0
    %126 = vmatprep.subr.mxu0 0.0
    %127 = vmatpush1.msra.mxu0 0.0
    %128 = vmatprep.subr.mxu0 0.0
    %129 = vmatpush1.msra.mxu0 0.0
    %130 = vmatprep.subr.mxu0 0.0
    %131 = vmatpush1.msra.mxu0 0.0
    %132 = vmatprep.subr.mxu0 0.0
    %133 = vmatpush1.msra.mxu0 0.0
    %134 = vmatprep.subr.mxu0 0.0
    %135 = vmatpush1.msra.mxu0 0.0
    %136 = vmatprep.subr.mxu0 0.0
    %137 = vmatpush1.msra.mxu0 0.0
    %138 = vmatprep.subr.mxu0 0.0
    %139 = vmatpush1.msra.mxu0 0.0
    %140 = vmatprep.subr.mxu0 0.0
    %141 = vmatpush1.msra.mxu0 0.0
    %142 = vmatprep.subr.mxu0 0.0
    %143 = vmatpush1.msra.mxu0 0.0
    %144 = vmatprep.subr.mxu0 0.0
    %145 = vmatpush1.msra.mxu0 0.0
    %146 = vmatprep.subr.mxu0 0.0
    %147 = vmatpush1.msra.mxu0 0.0
    %148 = vmatprep.subr.mxu0 0.0
    %149 = vmatpush1.msra.mxu0 0.0
    %150 = vmatprep.subr.mxu0 0.0
    %151 = vmatpush1.msra.mxu0 0.0
    %152 = vmatprep.subr.mxu0 0.0
    %153 = vmatpush1.msra.mxu0 0.0
    %154 = vmatprep.subr.mxu0 0.0
    %155 = vmatpush1.msra.mxu0 0.0
    %156 = vmatprep.subr.mxu0 0.0
    %157 = vmatpush1.msra.mxu0 0.0
    %158 = vmatprep.mubr.f32.mxu0 0.0
    %159 = vmatmul.mubr.f32.gmra.mrb[0].mxu0 %v83
    %v160 = vpop.f32.mrb[0].mxu0
    %v161 = vadd.f32 %v79, %v160
    %v162 = vpop.f32.mrb[0].mxu0
    %163 = vmatprep.mubr.f32.mxu0 0.0
    %164 = vmatmul.mubr.f32.gmra.mrb[0].mxu0 %v86
    %v165 = vpop.f32.mrb[0].mxu0
    %v166 = vadd.f32 %v79, %v165
    %v167 = vpop.f32.mrb[0].mxu0
    %168 = vmatprep.mubr.f32.mxu0 0.0
    %169 = vmatmul.mubr.f32.gmra.mrb[0].mxu0 %v89
    %v170 = vpop.f32.mrb[0].mxu0
    %v171 = vadd.f32 %v79, %v170
    %v172 = vpop.f32.mrb[0].mxu0
    %173 = vmatprep.mubr.f32.mxu0 0.0
    %174 = vmatmul.mubr.f32.gmra.mrb[0].mxu0 %v92
    %v175 = vpop.f32.mrb[0].mxu0
    %v176 = vadd.f32 %v79, %v175
    %v177 = vpop.f32.mrb[0].mxu0
    %178 = vdwg.mxu0
    %v179 = vlaneseq
    %v180 = vand.u32 %v179, 127
    %v181 = vlaneseq
    %v182 = vshrl.u32 %v181, 7
    %v183 = vsub.s32 0, %v182
    %v184 = vrot.slane %v56, %v183
    %186 = vbcast.lane.b32.xlu0 %v184, 256
    %v187 = vpop.permute.xlu0 %186
    %v188 = vlaneseq
    %v189 = vshrl.u32 %v188, 7
    %v190 = vsub.s32 1, %v189
    %v191 = vrot.slane %v56, %v190
    %193 = vbcast.lane.b32.xlu0 %v191, 256
    %v194 = vpop.permute.xlu0 %193
    %v195 = vlaneseq
    %v196 = vshrl.u32 %v195, 7
    %v197 = vsub.s32 2, %v196
    %v198 = vrot.slane %v56, %v197
    %200 = vbcast.lane.b32.xlu0 %v198, 256
    %v201 = vpop.permute.xlu0 %200
    %v202 = vlaneseq
    %v203 = vshrl.u32 %v202, 7
    %v204 = vsub.s32 3, %v203
    %v205 = vrot.slane %v56, %v204
    %207 = vbcast.lane.b32.xlu0 %v205, 256
    %v208 = vpop.permute.xlu0 %207
    %v209 = vlaneseq
    %v210 = vshrl.u32 %v209, 7
    %v211 = vsub.s32 4, %v210
    %v212 = vrot.slane %v56, %v211
    %214 = vbcast.lane.b32.xlu0 %v212, 256
    %v215 = vpop.permute.xlu0 %214
    %v216 = vlaneseq
    %v217 = vshrl.u32 %v216, 7
    %v218 = vsub.s32 5, %v217
    %v219 = vrot.slane %v56, %v218
    %221 = vbcast.lane.b32.xlu0 %v219, 256
    %v222 = vpop.permute.xlu0 %221
    %v223 = vlaneseq
    %v224 = vshrl.u32 %v223, 7
    %v225 = vsub.s32 6, %v224
    %v226 = vrot.slane %v56, %v225
    %228 = vbcast.lane.b32.xlu0 %v226, 256
    %v229 = vpop.permute.xlu0 %228
    %v230 = vlaneseq
    %v231 = vshrl.u32 %v230, 7
    %v232 = vsub.s32 7, %v231
    %v233 = vrot.slane %v56, %v232
    %235 = vbcast.lane.b32.xlu0 %v233, 256
    %v236 = vpop.permute.xlu0 %235
    %vm237 = vcmp.eq.s32.totalorder %v187, %v180
    %vm238 = vcmp.eq.s32.totalorder %v194, %v180
    %vm239 = vcmp.eq.s32.totalorder %v201, %v180
    %vm240 = vcmp.eq.s32.totalorder %v208, %v180
    %vm241 = vcmp.eq.s32.totalorder %v215, %v180
    %vm242 = vcmp.eq.s32.totalorder %v222, %v180
    %vm243 = vcmp.eq.s32.totalorder %v229, %v180
    %vm244 = vcmp.eq.s32.totalorder %v236, %v180
    %v245 = vsel %vm237, 1, 0
    %v246 = vsel %vm238, 1, 0
    %v247 = vsel %vm239, 1, 0
    %v248 = vsel %vm240, 1, 0
    %v249 = vsel %vm241, 1, 0
    %v250 = vsel %vm242, 1, 0
    %v251 = vsel %vm243, 1, 0
    %v252 = vsel %vm244, 1, 0
    %v253 = vcvt.s32.f32 %v245
    %v254 = vcvt.s32.f32 %v246
    %v255 = vcvt.s32.f32 %v247
    %v256 = vcvt.s32.f32 %v248
    %v257 = vcvt.s32.f32 %v249
    %v258 = vcvt.s32.f32 %v250
    %v259 = vcvt.s32.f32 %v251
    %v260 = vcvt.s32.f32 %v252
    %vm261 = vcmask 220160
    %v263 = vsel %vm261, %v253, 0
    %v266 = vsel %vm261, %v254, 0
    %v269 = vsel %vm261, %v255, 0
    %v272 = vsel %vm261, %v256, 0
    %v275 = vsel %vm261, %v257, 0
    %v278 = vsel %vm261, %v258, 0
    %v281 = vsel %vm261, %v259, 0
    %v284 = vsel %vm261, %v260, 0
    %vm286 = vcmask 1042432
    %v288 = vsel %vm286, %v176, 0
    %290 = vmatprep.subr.mxu0 0.0
    %291 = vmatpush1.msra.mxu0 %v161
    %292 = vmatprep.subr.mxu0 0.0
    %293 = vmatpush1.msra.mxu0 %v166
    %294 = vmatprep.subr.mxu0 0.0
    %295 = vmatpush1.msra.mxu0 %v171
    %296 = vmatprep.subr.mxu0 0.0
    %297 = vmatpush1.msra.mxu0 %v288
    %298 = vmatprep.subr.mxu0 0.0
    %299 = vmatpush1.msra.mxu0 0.0
    %300 = vmatprep.subr.mxu0 0.0
    %301 = vmatpush1.msra.mxu0 0.0
    %302 = vmatprep.subr.mxu0 0.0
    %303 = vmatpush1.msra.mxu0 0.0
    %304 = vmatprep.subr.mxu0 0.0
    %305 = vmatpush1.msra.mxu0 0.0
    %306 = vmatprep.subr.mxu0 0.0
    %307 = vmatpush1.msra.mxu0 0.0
    %308 = vmatprep.subr.mxu0 0.0
    %309 = vmatpush1.msra.mxu0 0.0
    %310 = vmatprep.subr.mxu0 0.0
    %311 = vmatpush1.msra.mxu0 0.0
    %312 = vmatprep.subr.mxu0 0.0
    %313 = vmatpush1.msra.mxu0 0.0
    %314 = vmatprep.subr.mxu0 0.0
    %315 = vmatpush1.msra.mxu0 0.0
    %316 = vmatprep.subr.mxu0 0.0
    %317 = vmatpush1.msra.mxu0 0.0
    %318 = vmatprep.subr.mxu0 0.0
    %319 = vmatpush1.msra.mxu0 0.0
    %320 = vmatprep.subr.mxu0 0.0
    %321 = vmatpush1.msra.mxu0 0.0
    %322 = vmatprep.subr.mxu0 0.0
    %323 = vmatpush1.msra.mxu0 0.0
    %324 = vmatprep.subr.mxu0 0.0
    %325 = vmatpush1.msra.mxu0 0.0
    %326 = vmatprep.subr.mxu0 0.0
    %327 = vmatpush1.msra.mxu0 0.0
    %328 = vmatprep.subr.mxu0 0.0
    %329 = vmatpush1.msra.mxu0 0.0
    %330 = vmatprep.subr.mxu0 0.0
    %331 = vmatpush1.msra.mxu0 0.0
    %332 = vmatprep.subr.mxu0 0.0
    %333 = vmatpush1.msra.mxu0 0.0
    %334 = vmatprep.subr.mxu0 0.0
    %335 = vmatpush1.msra.mxu0 0.0
    %336 = vmatprep.subr.mxu0 0.0
    %337 = vmatpush1.msra.mxu0 0.0
    %338 = vmatprep.subr.mxu0 0.0
    %339 = vmatpush1.msra.mxu0 0.0
    %340 = vmatprep.subr.mxu0 0.0
    %341 = vmatpush1.msra.mxu0 0.0
    %342 = vmatprep.subr.mxu0 0.0
    %343 = vmatpush1.msra.mxu0 0.0
    %344 = vmatprep.subr.mxu0 0.0
    %345 = vmatpush1.msra.mxu0 0.0
    %346 = vmatprep.subr.mxu0 0.0
    %347 = vmatpush1.msra.mxu0 0.0
    %348 = vmatprep.subr.mxu0 0.0
    %349 = vmatpush1.msra.mxu0 0.0
    %350 = vmatprep.subr.mxu0 0.0
    %351 = vmatpush1.msra.mxu0 0.0
    %352 = vmatprep.subr.mxu0 0.0
    %353 = vmatpush1.msra.mxu0 0.0
    %354 = vmatprep.mubr.f32.mxu0 0.0
    %355 = vmatmul.mubr.f32.gmra.mrb[0].mxu0 %v263
    %v356 = vpop.f32.mrb[0].mxu0
    %v357 = vadd.f32 0.0, %v356
    %v358 = vpop.f32.mrb[0].mxu0
    %359 = vmatprep.mubr.f32.mxu0 0.0
    %360 = vmatmul.mubr.f32.gmra.mrb[0].mxu0 %v266
    %v361 = vpop.f32.mrb[0].mxu0
    %v362 = vadd.f32 0.0, %v361
    %v363 = vpop.f32.mrb[0].mxu0
    %364 = vmatprep.mubr.f32.mxu0 0.0
    %365 = vmatmul.mubr.f32.gmra.mrb[0].mxu0 %v269
    %v366 = vpop.f32.mrb[0].mxu0
    %v367 = vadd.f32 0.0, %v366
    %v368 = vpop.f32.mrb[0].mxu0
    %369 = vmatprep.mubr.f32.mxu0 0.0
    %370 = vmatmul.mubr.f32.gmra.mrb[0].mxu0 %v272
    %v371 = vpop.f32.mrb[0].mxu0
    %v372 = vadd.f32 0.0, %v371
    %v373 = vpop.f32.mrb[0].mxu0
    %374 = vmatprep.mubr.f32.mxu0 0.0
    %375 = vmatmul.mubr.f32.gmra.mrb[0].mxu0 %v275
    %v376 = vpop.f32.mrb[0].mxu0
    %v377 = vadd.f32 0.0, %v376
    %v378 = vpop.f32.mrb[0].mxu0
    %379 = vmatprep.mubr.f32.mxu0 0.0
    %380 = vmatmul.mubr.f32.gmra.mrb[0].mxu0 %v278
    %v381 = vpop.f32.mrb[0].mxu0
    %v382 = vadd.f32 0.0, %v381
    %v383 = vpop.f32.mrb[0].mxu0
    %384 = vmatprep.mubr.f32.mxu0 0.0
    %385 = vmatmul.mubr.f32.gmra.mrb[0].mxu0 %v281
    %v386 = vpop.f32.mrb[0].mxu0
    %v387 = vadd.f32 0.0, %v386
    %v388 = vpop.f32.mrb[0].mxu0
    %389 = vmatprep.mubr.f32.mxu0 0.0
    %390 = vmatmul.mubr.f32.gmra.mrb[0].mxu0 %v284
    %v391 = vpop.f32.mrb[0].mxu0
    %v392 = vadd.f32 0.0, %v391
    %v393 = vpop.f32.mrb[0].mxu0
    %394 = vdwg.mxu0
    %v395 = vtanh.pop %v357
    %vm396 = vcmask 261120
    %v398 = vsel %vm396, %v395, 0
    %400 = vmatprep.subr.mxu0 0.0
    %401 = vmatpush1.msra.mxu0 %v63
    %402 = vmatprep.subr.mxu0 0.0
    %403 = vmatpush1.msra.mxu0 %v64
    %404 = vmatprep.subr.mxu0 0.0
    %405 = vmatpush1.msra.mxu0 %v65
    %406 = vmatprep.subr.mxu0 0.0
    %407 = vmatpush1.msra.mxu0 %v66
    %408 = vmatprep.subr.mxu0 0.0
    %409 = vmatpush1.msra.mxu0 0.0
    %410 = vmatprep.subr.mxu0 0.0
    %411 = vmatpush1.msra.mxu0 0.0
    %412 = vmatprep.subr.mxu0 0.0
    %413 = vmatpush1.msra.mxu0 0.0
    %414 = vmatprep.subr.mxu0 0.0
    %415 = vmatpush1.msra.mxu0 0.0
    %416 = vmatprep.subr.mxu0 0.0
    %417 = vmatpush1.msra.mxu0 0.0
    %418 = vmatprep.subr.mxu0 0.0
    %419 = vmatpush1.msra.mxu0 0.0
    %420 = vmatprep.subr.mxu0 0.0
    %421 = vmatpush1.msra.mxu0 0.0
    %422 = vmatprep.subr.mxu0 0.0
    %423 = vmatpush1.msra.mxu0 0.0
    %424 = vmatprep.subr.mxu0 0.0
    %425 = vmatpush1.msra.mxu0 0.0
    %426 = vmatprep.subr.mxu0 0.0
    %427 = vmatpush1.msra.mxu0 0.0
    %428 = vmatprep.subr.mxu0 0.0
    %429 = vmatpush1.msra.mxu0 0.0
    %430 = vmatprep.subr.mxu0 0.0
    %431 = vmatpush1.msra.mxu0 0.0
    %432 = vmatprep.subr.mxu0 0.0
    %433 = vmatpush1.msra.mxu0 0.0
    %434 = vmatprep.subr.mxu0 0.0
    %435 = vmatpush1.msra.mxu0 0.0
    %436 = vmatprep.subr.mxu0 0.0
    %437 = vmatpush1.msra.mxu0 0.0
    %438 = vmatprep.subr.mxu0 0.0
    %439 = vmatpush1.msra.mxu0 0.0
    %440 = vmatprep.subr.mxu0 0.0
    %441 = vmatpush1.msra.mxu0 0.0
    %442 = vmatprep.subr.mxu0 0.0
    %443 = vmatpush1.msra.mxu0 0.0
    %444 = vmatprep.subr.mxu0 0.0
    %445 = vmatpush1.msra.mxu0 0.0
    %446 = vmatprep.subr.mxu0 0.0
    %447 = vmatpush1.msra.mxu0 0.0
    %448 = vmatprep.subr.mxu0 0.0
    %449 = vmatpush1.msra.mxu0 0.0
    %450 = vmatprep.subr.mxu0 0.0
    %451 = vmatpush1.msra.mxu0 0.0
    %452 = vmatprep.subr.mxu0 0.0
    %453 = vmatpush1.msra.mxu0 0.0
    %454 = vmatprep.subr.mxu0 0.0
    %455 = vmatpush1.msra.mxu0 0.0
    %456 = vmatprep.subr.mxu0 0.0
    %457 = vmatpush1.msra.mxu0 0.0
    %458 = vmatprep.subr.mxu0 0.0
    %459 = vmatpush1.msra.mxu0 0.0
    %460 = vmatprep.subr.mxu0 0.0
    %461 = vmatpush1.msra.mxu0 0.0
    %462 = vmatprep.subr.mxu0 0.0
    %463 = vmatpush1.msra.mxu0 0.0
    %464 = vmatprep.mubr.f32.mxu0 0.0
    %465 = vmatmul.mubr.f32.gmra.mrb[0].mxu0 %v398
    %v466 = vpop.f32.mrb[0].mxu0
    %v467 = vadd.f32 0.0, %v466
    %v468 = vpop.f32.mrb[0].mxu0
    %469 = vdwg.mxu0
    %v470 = vadd.f32 %v362, %v467
    %v471 = vtanh.pop %v470
    %v473 = vsel %vm396, %v471, 0
    %475 = vmatprep.subr.mxu0 0.0
    %476 = vmatpush1.msra.mxu0 %v63
    %477 = vmatprep.subr.mxu0 0.0
    %478 = vmatpush1.msra.mxu0 %v64
    %479 = vmatprep.subr.mxu0 0.0
    %480 = vmatpush1.msra.mxu0 %v65
    %481 = vmatprep.subr.mxu0 0.0
    %482 = vmatpush1.msra.mxu0 %v66
    %483 = vmatprep.subr.mxu0 0.0
    %484 = vmatpush1.msra.mxu0 0.0
    %485 = vmatprep.subr.mxu0 0.0
    %486 = vmatpush1.msra.mxu0 0.0
    %487 = vmatprep.subr.mxu0 0.0
    %488 = vmatpush1.msra.mxu0 0.0
    %489 = vmatprep.subr.mxu0 0.0
    %490 = vmatpush1.msra.mxu0 0.0
    %491 = vmatprep.subr.mxu0 0.0
    %492 = vmatpush1.msra.mxu0 0.0
    %493 = vmatprep.subr.mxu0 0.0
    %494 = vmatpush1.msra.mxu0 0.0
    %495 = vmatprep.subr.mxu0 0.0
    %496 = vmatpush1.msra.mxu0 0.0
    %497 = vmatprep.subr.mxu0 0.0
    %498 = vmatpush1.msra.mxu0 0.0
    %499 = vmatprep.subr.mxu0 0.0
    %500 = vmatpush1.msra.mxu0 0.0
    %501 = vmatprep.subr.mxu0 0.0
    %502 = vmatpush1.msra.mxu0 0.0
    %503 = vmatprep.subr.mxu0 0.0
    %504 = vmatpush1.msra.mxu0 0.0
    %505 = vmatprep.subr.mxu0 0.0
    %506 = vmatpush1.msra.mxu0 0.0
    %507 = vmatprep.subr.mxu0 0.0
    %508 = vmatpush1.msra.mxu0 0.0
    %509 = vmatprep.subr.mxu0 0.0
    %510 = vmatpush1.msra.mxu0 0.0
    %511 = vmatprep.subr.mxu0 0.0
    %512 = vmatpush1.msra.mxu0 0.0
    %513 = vmatprep.subr.mxu0 0.0
    %514 = vmatpush1.msra.mxu0 0.0
    %515 = vmatprep.subr.mxu0 0.0
    %516 = vmatpush1.msra.mxu0 0.0
    %517 = vmatprep.subr.mxu0 0.0
    %518 = vmatpush1.msra.mxu0 0.0
    %519 = vmatprep.subr.mxu0 0.0
    %520 = vmatpush1.msra.mxu0 0.0
    %521 = vmatprep.subr.mxu0 0.0
    %522 = vmatpush1.msra.mxu0 0.0
    %523 = vmatprep.subr.mxu0 0.0
    %524 = vmatpush1.msra.mxu0 0.0
    %525 = vmatprep.subr.mxu0 0.0
    %526 = vmatpush1.msra.mxu0 0.0
    %527 = vmatprep.subr.mxu0 0.0
    %528 = vmatpush1.msra.mxu0 0.0
    %529 = vmatprep.subr.mxu0 0.0
    %530 = vmatpush1.msra.mxu0 0.0
    %531 = vmatprep.subr.mxu0 0.0
    %532 = vmatpush1.msra.mxu0 0.0
    %533 = vmatprep.subr.mxu0 0.0
    %534 = vmatpush1.msra.mxu0 0.0
    %535 = vmatprep.subr.mxu0 0.0
    %536 = vmatpush1.msra.mxu0 0.0
    %537 = vmatprep.subr.mxu0 0.0
    %538 = vmatpush1.msra.mxu0 0.0
    %539 = vmatprep.mubr.f32.mxu0 0.0
    %540 = vmatmul.mubr.f32.gmra.mrb[0].mxu0 %v473
    %v541 = vpop.f32.mrb[0].mxu0
    %v542 = vadd.f32 0.0, %v541
    %v543 = vpop.f32.mrb[0].mxu0
    %544 = vdwg.mxu0
    %v545 = vadd.f32 %v367, %v542
    %v546 = vtanh.pop %v545
    %v548 = vsel %vm396, %v546, 0
    %550 = vmatprep.subr.mxu0 0.0
    %551 = vmatpush1.msra.mxu0 %v63
    %552 = vmatprep.subr.mxu0 0.0
    %553 = vmatpush1.msra.mxu0 %v64
    %554 = vmatprep.subr.mxu0 0.0
    %555 = vmatpush1.msra.mxu0 %v65
    %556 = vmatprep.subr.mxu0 0.0
    %557 = vmatpush1.msra.mxu0 %v66
    %558 = vmatprep.subr.mxu0 0.0
    %559 = vmatpush1.msra.mxu0 0.0
    %560 = vmatprep.subr.mxu0 0.0
    %561 = vmatpush1.msra.mxu0 0.0
    %562 = vmatprep.subr.mxu0 0.0
    %563 = vmatpush1.msra.mxu0 0.0
    %564 = vmatprep.subr.mxu0 0.0
    %565 = vmatpush1.msra.mxu0 0.0
    %566 = vmatprep.subr.mxu0 0.0
    %567 = vmatpush1.msra.mxu0 0.0
    %568 = vmatprep.subr.mxu0 0.0
    %569 = vmatpush1.msra.mxu0 0.0
    %570 = vmatprep.subr.mxu0 0.0
    %571 = vmatpush1.msra.mxu0 0.0
    %572 = vmatprep.subr.mxu0 0.0
    %573 = vmatpush1.msra.mxu0 0.0
    %574 = vmatprep.subr.mxu0 0.0
    %575 = vmatpush1.msra.mxu0 0.0
    %576 = vmatprep.subr.mxu0 0.0
    %577 = vmatpush1.msra.mxu0 0.0
    %578 = vmatprep.subr.mxu0 0.0
    %579 = vmatpush1.msra.mxu0 0.0
    %580 = vmatprep.subr.mxu0 0.0
    %581 = vmatpush1.msra.mxu0 0.0
    %582 = vmatprep.subr.mxu0 0.0
    %583 = vmatpush1.msra.mxu0 0.0
    %584 = vmatprep.subr.mxu0 0.0
    %585 = vmatpush1.msra.mxu0 0.0
    %586 = vmatprep.subr.mxu0 0.0
    %587 = vmatpush1.msra.mxu0 0.0
    %588 = vmatprep.subr.mxu0 0.0
    %589 = vmatpush1.msra.mxu0 0.0
    %590 = vmatprep.subr.mxu0 0.0
    %591 = vmatpush1.msra.mxu0 0.0
    %592 = vmatprep.subr.mxu0 0.0
    %593 = vmatpush1.msra.mxu0 0.0
    %594 = vmatprep.subr.mxu0 0.0
    %595 = vmatpush1.msra.mxu0 0.0
    %596 = vmatprep.subr.mxu0 0.0
    %597 = vmatpush1.msra.mxu0 0.0
    %598 = vmatprep.subr.mxu0 0.0
    %599 = vmatpush1.msra.mxu0 0.0
    %600 = vmatprep.subr.mxu0 0.0
    %601 = vmatpush1.msra.mxu0 0.0
    %602 = vmatprep.subr.mxu0 0.0
    %603 = vmatpush1.msra.mxu0 0.0
    %604 = vmatprep.subr.mxu0 0.0
    %605 = vmatpush1.msra.mxu0 0.0
    %606 = vmatprep.subr.mxu0 0.0
    %607 = vmatpush1.msra.mxu0 0.0
    %608 = vmatprep.subr.mxu0 0.0
    %609 = vmatpush1.msra.mxu0 0.0
    %610 = vmatprep.subr.mxu0 0.0
    %611 = vmatpush1.msra.mxu0 0.0
    %612 = vmatprep.subr.mxu0 0.0
    %613 = vmatpush1.msra.mxu0 0.0
    %614 = vmatprep.mubr.f32.mxu0 0.0
    %615 = vmatmul.mubr.f32.gmra.mrb[0].mxu0 %v548
    %v616 = vpop.f32.mrb[0].mxu0
    %v617 = vadd.f32 0.0, %v616
    %v618 = vpop.f32.mrb[0].mxu0
    %619 = vdwg.mxu0
    %v620 = vadd.f32 %v372, %v617
    %v621 = vtanh.pop %v620
    %v623 = vsel %vm396, %v621, 0
    %625 = vmatprep.subr.mxu0 0.0
    %626 = vmatpush1.msra.mxu0 %v63
    %627 = vmatprep.subr.mxu0 0.0
    %628 = vmatpush1.msra.mxu0 %v64
    %629 = vmatprep.subr.mxu0 0.0
    %630 = vmatpush1.msra.mxu0 %v65
    %631 = vmatprep.subr.mxu0 0.0
    %632 = vmatpush1.msra.mxu0 %v66
    %633 = vmatprep.subr.mxu0 0.0
    %634 = vmatpush1.msra.mxu0 0.0
    %635 = vmatprep.subr.mxu0 0.0
    %636 = vmatpush1.msra.mxu0 0.0
    %637 = vmatprep.subr.mxu0 0.0
    %638 = vmatpush1.msra.mxu0 0.0
    %639 = vmatprep.subr.mxu0 0.0
    %640 = vmatpush1.msra.mxu0 0.0
    %641 = vmatprep.subr.mxu0 0.0
    %642 = vmatpush1.msra.mxu0 0.0
    %643 = vmatprep.subr.mxu0 0.0
    %644 = vmatpush1.msra.mxu0 0.0
    %645 = vmatprep.subr.mxu0 0.0
    %646 = vmatpush1.msra.mxu0 0.0
    %647 = vmatprep.subr.mxu0 0.0
    %648 = vmatpush1.msra.mxu0 0.0
    %649 = vmatprep.subr.mxu0 0.0
    %650 = vmatpush1.msra.mxu0 0.0
    %651 = vmatprep.subr.mxu0 0.0
    %652 = vmatpush1.msra.mxu0 0.0
    %653 = vmatprep.subr.mxu0 0.0
    %654 = vmatpush1.msra.mxu0 0.0
    %655 = vmatprep.subr.mxu0 0.0
    %656 = vmatpush1.msra.mxu0 0.0
    %657 = vmatprep.subr.mxu0 0.0
    %658 = vmatpush1.msra.mxu0 0.0
    %659 = vmatprep.subr.mxu0 0.0
    %660 = vmatpush1.msra.mxu0 0.0
    %661 = vmatprep.subr.mxu0 0.0
    %662 = vmatpush1.msra.mxu0 0.0
    %663 = vmatprep.subr.mxu0 0.0
    %664 = vmatpush1.msra.mxu0 0.0
    %665 = vmatprep.subr.mxu0 0.0
    %666 = vmatpush1.msra.mxu0 0.0
    %667 = vmatprep.subr.mxu0 0.0
    %668 = vmatpush1.msra.mxu0 0.0
    %669 = vmatprep.subr.mxu0 0.0
    %670 = vmatpush1.msra.mxu0 0.0
    %671 = vmatprep.subr.mxu0 0.0
    %672 = vmatpush1.msra.mxu0 0.0
    %673 = vmatprep.subr.mxu0 0.0
    %674 = vmatpush1.msra.mxu0 0.0
    %675 = vmatprep.subr.mxu0 0.0
    %676 = vmatpush1.msra.mxu0 0.0
    %677 = vmatprep.subr.mxu0 0.0
    %678 = vmatpush1.msra.mxu0 0.0
    %679 = vmatprep.subr.mxu0 0.0
    %680 = vmatpush1.msra.mxu0 0.0
    %681 = vmatprep.subr.mxu0 0.0
    %682 = vmatpush1.msra.mxu0 0.0
    %683 = vmatprep.subr.mxu0 0.0
    %684 = vmatpush1.msra.mxu0 0.0
    %685 = vmatprep.subr.mxu0 0.0
    %686 = vmatpush1.msra.mxu0 0.0
    %687 = vmatprep.subr.mxu0 0.0
    %688 = vmatpush1.msra.mxu0 0.0
    %689 = vmatprep.mubr.f32.mxu0 0.0
    %690 = vmatmul.mubr.f32.gmra.mrb[0].mxu0 %v623
    %v691 = vpop.f32.mrb[0].mxu0
    %v692 = vadd.f32 0.0, %v691
    %v693 = vpop.f32.mrb[0].mxu0
    %694 = vdwg.mxu0
    %v695 = vadd.f32 %v377, %v692
    %v696 = vtanh.pop %v695
    %v698 = vsel %vm396, %v696, 0
    %700 = vmatprep.subr.mxu0 0.0
    %701 = vmatpush1.msra.mxu0 %v63
    %702 = vmatprep.subr.mxu0 0.0
    %703 = vmatpush1.msra.mxu0 %v64
    %704 = vmatprep.subr.mxu0 0.0
    %705 = vmatpush1.msra.mxu0 %v65
    %706 = vmatprep.subr.mxu0 0.0
    %707 = vmatpush1.msra.mxu0 %v66
    %708 = vmatprep.subr.mxu0 0.0
    %709 = vmatpush1.msra.mxu0 0.0
    %710 = vmatprep.subr.mxu0 0.0
    %711 = vmatpush1.msra.mxu0 0.0
    %712 = vmatprep.subr.mxu0 0.0
    %713 = vmatpush1.msra.mxu0 0.0
    %714 = vmatprep.subr.mxu0 0.0
    %715 = vmatpush1.msra.mxu0 0.0
    %716 = vmatprep.subr.mxu0 0.0
    %717 = vmatpush1.msra.mxu0 0.0
    %718 = vmatprep.subr.mxu0 0.0
    %719 = vmatpush1.msra.mxu0 0.0
    %720 = vmatprep.subr.mxu0 0.0
    %721 = vmatpush1.msra.mxu0 0.0
    %722 = vmatprep.subr.mxu0 0.0
    %723 = vmatpush1.msra.mxu0 0.0
    %724 = vmatprep.subr.mxu0 0.0
    %725 = vmatpush1.msra.mxu0 0.0
    %726 = vmatprep.subr.mxu0 0.0
    %727 = vmatpush1.msra.mxu0 0.0
    %728 = vmatprep.subr.mxu0 0.0
    %729 = vmatpush1.msra.mxu0 0.0
    %730 = vmatprep.subr.mxu0 0.0
    %731 = vmatpush1.msra.mxu0 0.0
    %732 = vmatprep.subr.mxu0 0.0
    %733 = vmatpush1.msra.mxu0 0.0
    %734 = vmatprep.subr.mxu0 0.0
    %735 = vmatpush1.msra.mxu0 0.0
    %736 = vmatprep.subr.mxu0 0.0
    %737 = vmatpush1.msra.mxu0 0.0
    %738 = vmatprep.subr.mxu0 0.0
    %739 = vmatpush1.msra.mxu0 0.0
    %740 = vmatprep.subr.mxu0 0.0
    %741 = vmatpush1.msra.mxu0 0.0
    %742 = vmatprep.subr.mxu0 0.0
    %743 = vmatpush1.msra.mxu0 0.0
    %744 = vmatprep.subr.mxu0 0.0
    %745 = vmatpush1.msra.mxu0 0.0
    %746 = vmatprep.subr.mxu0 0.0
    %747 = vmatpush1.msra.mxu0 0.0
    %748 = vmatprep.subr.mxu0 0.0
    %749 = vmatpush1.msra.mxu0 0.0
    %750 = vmatprep.subr.mxu0 0.0
    %751 = vmatpush1.msra.mxu0 0.0
    %752 = vmatprep.subr.mxu0 0.0
    %753 = vmatpush1.msra.mxu0 0.0
    %754 = vmatprep.subr.mxu0 0.0
    %755 = vmatpush1.msra.mxu0 0.0
    %756 = vmatprep.subr.mxu0 0.0
    %757 = vmatpush1.msra.mxu0 0.0
    %758 = vmatprep.subr.mxu0 0.0
    %759 = vmatpush1.msra.mxu0 0.0
    %760 = vmatprep.subr.mxu0 0.0
    %761 = vmatpush1.msra.mxu0 0.0
    %762 = vmatprep.subr.mxu0 0.0
    %763 = vmatpush1.msra.mxu0 0.0
    %764 = vmatprep.mubr.f32.mxu0 0.0
    %765 = vmatmul.mubr.f32.gmra.mrb[0].mxu0 %v698
    %v766 = vpop.f32.mrb[0].mxu0
    %v767 = vadd.f32 0.0, %v766
    %v768 = vpop.f32.mrb[0].mxu0
    %769 = vdwg.mxu0
    %v770 = vadd.f32 %v382, %v767
    %v771 = vtanh.pop %v770
    %v773 = vsel %vm396, %v771, 0
    %775 = vmatprep.subr.mxu0 0.0
    %776 = vmatpush1.msra.mxu0 %v63
    %777 = vmatprep.subr.mxu0 0.0
    %778 = vmatpush1.msra.mxu0 %v64
    %779 = vmatprep.subr.mxu0 0.0
    %780 = vmatpush1.msra.mxu0 %v65
    %781 = vmatprep.subr.mxu0 0.0
    %782 = vmatpush1.msra.mxu0 %v66
    %783 = vmatprep.subr.mxu0 0.0
    %784 = vmatpush1.msra.mxu0 0.0
    %785 = vmatprep.subr.mxu0 0.0
    %786 = vmatpush1.msra.mxu0 0.0
    %787 = vmatprep.subr.mxu0 0.0
    %788 = vmatpush1.msra.mxu0 0.0
    %789 = vmatprep.subr.mxu0 0.0
    %790 = vmatpush1.msra.mxu0 0.0
    %791 = vmatprep.subr.mxu0 0.0
    %792 = vmatpush1.msra.mxu0 0.0
    %793 = vmatprep.subr.mxu0 0.0
    %794 = vmatpush1.msra.mxu0 0.0
    %795 = vmatprep.subr.mxu0 0.0
    %796 = vmatpush1.msra.mxu0 0.0
    %797 = vmatprep.subr.mxu0 0.0
    %798 = vmatpush1.msra.mxu0 0.0
    %799 = vmatprep.subr.mxu0 0.0
    %800 = vmatpush1.msra.mxu0 0.0
    %801 = vmatprep.subr.mxu0 0.0
    %802 = vmatpush1.msra.mxu0 0.0
    %803 = vmatprep.subr.mxu0 0.0
    %804 = vmatpush1.msra.mxu0 0.0
    %805 = vmatprep.subr.mxu0 0.0
    %806 = vmatpush1.msra.mxu0 0.0
    %807 = vmatprep.subr.mxu0 0.0
    %808 = vmatpush1.msra.mxu0 0.0
    %809 = vmatprep.subr.mxu0 0.0
    %810 = vmatpush1.msra.mxu0 0.0
    %811 = vmatprep.subr.mxu0 0.0
    %812 = vmatpush1.msra.mxu0 0.0
    %813 = vmatprep.subr.mxu0 0.0
    %814 = vmatpush1.msra.mxu0 0.0
    %815 = vmatprep.subr.mxu0 0.0
    %816 = vmatpush1.msra.mxu0 0.0
    %817 = vmatprep.subr.mxu0 0.0
    %818 = vmatpush1.msra.mxu0 0.0
    %819 = vmatprep.subr.mxu0 0.0
    %820 = vmatpush1.msra.mxu0 0.0
    %821 = vmatprep.subr.mxu0 0.0
    %822 = vmatpush1.msra.mxu0 0.0
    %823 = vmatprep.subr.mxu0 0.0
    %824 = vmatpush1.msra.mxu0 0.0
    %825 = vmatprep.subr.mxu0 0.0
    %826 = vmatpush1.msra.mxu0 0.0
    %827 = vmatprep.subr.mxu0 0.0
    %828 = vmatpush1.msra.mxu0 0.0
    %829 = vmatprep.subr.mxu0 0.0
    %830 = vmatpush1.msra.mxu0 0.0
    %831 = vmatprep.subr.mxu0 0.0
    %832 = vmatpush1.msra.mxu0 0.0
    %833 = vmatprep.subr.mxu0 0.0
    %834 = vmatpush1.msra.mxu0 0.0
    %835 = vmatprep.subr.mxu0 0.0
    %836 = vmatpush1.msra.mxu0 0.0
    %837 = vmatprep.subr.mxu0 0.0
    %838 = vmatpush1.msra.mxu0 0.0
    %839 = vmatprep.mubr.f32.mxu0 0.0
    %840 = vmatmul.mubr.f32.gmra.mrb[0].mxu0 %v773
    %v841 = vpop.f32.mrb[0].mxu0
    %v842 = vadd.f32 0.0, %v841
    %v843 = vpop.f32.mrb[0].mxu0
    %844 = vdwg.mxu0
    %v845 = vadd.f32 %v387, %v842
    %v846 = vtanh.pop %v845
    %v848 = vsel %vm396, %v846, 0
    %850 = vmatprep.subr.mxu0 0.0
    %851 = vmatpush1.msra.mxu0 %v63
    %852 = vmatprep.subr.mxu0 0.0
    %853 = vmatpush1.msra.mxu0 %v64
    %854 = vmatprep.subr.mxu0 0.0
    %855 = vmatpush1.msra.mxu0 %v65
    %856 = vmatprep.subr.mxu0 0.0
    %857 = vmatpush1.msra.mxu0 %v66
    %858 = vmatprep.subr.mxu0 0.0
    %859 = vmatpush1.msra.mxu0 0.0
    %860 = vmatprep.subr.mxu0 0.0
    %861 = vmatpush1.msra.mxu0 0.0
    %862 = vmatprep.subr.mxu0 0.0
    %863 = vmatpush1.msra.mxu0 0.0
    %864 = vmatprep.subr.mxu0 0.0
    %865 = vmatpush1.msra.mxu0 0.0
    %866 = vmatprep.subr.mxu0 0.0
    %867 = vmatpush1.msra.mxu0 0.0
    %868 = vmatprep.subr.mxu0 0.0
    %869 = vmatpush1.msra.mxu0 0.0
    %870 = vmatprep.subr.mxu0 0.0
    %871 = vmatpush1.msra.mxu0 0.0
    %872 = vmatprep.subr.mxu0 0.0
    %873 = vmatpush1.msra.mxu0 0.0
    %874 = vmatprep.subr.mxu0 0.0
    %875 = vmatpush1.msra.mxu0 0.0
    %876 = vmatprep.subr.mxu0 0.0
    %877 = vmatpush1.msra.mxu0 0.0
    %878 = vmatprep.subr.mxu0 0.0
    %879 = vmatpush1.msra.mxu0 0.0
    %880 = vmatprep.subr.mxu0 0.0
    %881 = vmatpush1.msra.mxu0 0.0
    %882 = vmatprep.subr.mxu0 0.0
    %883 = vmatpush1.msra.mxu0 0.0
    %884 = vmatprep.subr.mxu0 0.0
    %885 = vmatpush1.msra.mxu0 0.0
    %886 = vmatprep.subr.mxu0 0.0
    %887 = vmatpush1.msra.mxu0 0.0
    %888 = vmatprep.subr.mxu0 0.0
    %889 = vmatpush1.msra.mxu0 0.0
    %890 = vmatprep.subr.mxu0 0.0
    %891 = vmatpush1.msra.mxu0 0.0
    %892 = vmatprep.subr.mxu0 0.0
    %893 = vmatpush1.msra.mxu0 0.0
    %894 = vmatprep.subr.mxu0 0.0
    %895 = vmatpush1.msra.mxu0 0.0
    %896 = vmatprep.subr.mxu0 0.0
    %897 = vmatpush1.msra.mxu0 0.0
    %898 = vmatprep.subr.mxu0 0.0
    %899 = vmatpush1.msra.mxu0 0.0
    %900 = vmatprep.subr.mxu0 0.0
    %901 = vmatpush1.msra.mxu0 0.0
    %902 = vmatprep.subr.mxu0 0.0
    %903 = vmatpush1.msra.mxu0 0.0
    %904 = vmatprep.subr.mxu0 0.0
    %905 = vmatpush1.msra.mxu0 0.0
    %906 = vmatprep.subr.mxu0 0.0
    %907 = vmatpush1.msra.mxu0 0.0
    %908 = vmatprep.subr.mxu0 0.0
    %909 = vmatpush1.msra.mxu0 0.0
    %910 = vmatprep.subr.mxu0 0.0
    %911 = vmatpush1.msra.mxu0 0.0
    %912 = vmatprep.subr.mxu0 0.0
    %913 = vmatpush1.msra.mxu0 0.0
    %914 = vmatprep.mubr.f32.mxu0 0.0
    %915 = vmatmul.mubr.f32.gmra.mrb[0].mxu0 %v848
    %v916 = vpop.f32.mrb[0].mxu0
    %v917 = vadd.f32 0.0, %v916
    %v918 = vpop.f32.mrb[0].mxu0
    %919 = vdwg.mxu0
    %v920 = vadd.f32 %v392, %v917
    %v921 = vtanh.pop %v920
    %v923 = vlaneseq
    %v924 = vshrl.u32 %v923, 7
    %v925 = vsub.s32 0, %v924
    %v926 = vrot.slane %v74, %v925
    %v929 = vsel %vm396, %v921, 0
    %931 = vmatprep.subr.mxu0 0.0
    %932 = vmatpush1.msra.mxu0 %v70
    %933 = vmatprep.subr.mxu0 0.0
    %934 = vmatpush1.msra.mxu0 %v71
    %935 = vmatprep.subr.mxu0 0.0
    %936 = vmatpush1.msra.mxu0 %v72
    %937 = vmatprep.subr.mxu0 0.0
    %938 = vmatpush1.msra.mxu0 %v73
    %939 = vmatprep.subr.mxu0 0.0
    %940 = vmatpush1.msra.mxu0 0.0
    %941 = vmatprep.subr.mxu0 0.0
    %942 = vmatpush1.msra.mxu0 0.0
    %943 = vmatprep.subr.mxu0 0.0
    %944 = vmatpush1.msra.mxu0 0.0
    %945 = vmatprep.subr.mxu0 0.0
    %946 = vmatpush1.msra.mxu0 0.0
    %947 = vmatprep.subr.mxu0 0.0
    %948 = vmatpush1.msra.mxu0 0.0
    %949 = vmatprep.subr.mxu0 0.0
    %950 = vmatpush1.msra.mxu0 0.0
    %951 = vmatprep.subr.mxu0 0.0
    %952 = vmatpush1.msra.mxu0 0.0
    %953 = vmatprep.subr.mxu0 0.0
    %954 = vmatpush1.msra.mxu0 0.0
    %955 = vmatprep.subr.mxu0 0.0
    %956 = vmatpush1.msra.mxu0 0.0
    %957 = vmatprep.subr.mxu0 0.0
    %958 = vmatpush1.msra.mxu0 0.0
    %959 = vmatprep.subr.mxu0 0.0
    %960 = vmatpush1.msra.mxu0 0.0
    %961 = vmatprep.subr.mxu0 0.0
    %962 = vmatpush1.msra.mxu0 0.0
    %963 = vmatprep.subr.mxu0 0.0
    %964 = vmatpush1.msra.mxu0 0.0
    %965 = vmatprep.subr.mxu0 0.0
    %966 = vmatpush1.msra.mxu0 0.0
    %967 = vmatprep.subr.mxu0 0.0
    %968 = vmatpush1.msra.mxu0 0.0
    %969 = vmatprep.subr.mxu0 0.0
    %970 = vmatpush1.msra.mxu0 0.0
    %971 = vmatprep.subr.mxu0 0.0
    %972 = vmatpush1.msra.mxu0 0.0
    %973 = vmatprep.subr.mxu0 0.0
    %974 = vmatpush1.msra.mxu0 0.0
    %975 = vmatprep.subr.mxu0 0.0
    %976 = vmatpush1.msra.mxu0 0.0
    %977 = vmatprep.subr.mxu0 0.0
    %978 = vmatpush1.msra.mxu0 0.0
    %979 = vmatprep.subr.mxu0 0.0
    %980 = vmatpush1.msra.mxu0 0.0
    %981 = vmatprep.subr.mxu0 0.0
    %982 = vmatpush1.msra.mxu0 0.0
    %983 = vmatprep.subr.mxu0 0.0
    %984 = vmatpush1.msra.mxu0 0.0
    %985 = vmatprep.subr.mxu0 0.0
    %986 = vmatpush1.msra.mxu0 0.0
    %987 = vmatprep.subr.mxu0 0.0
    %988 = vmatpush1.msra.mxu0 0.0
    %989 = vmatprep.subr.mxu0 0.0
    %990 = vmatpush1.msra.mxu0 0.0
    %991 = vmatprep.subr.mxu0 0.0
    %992 = vmatpush1.msra.mxu0 0.0
    %993 = vmatprep.subr.mxu0 0.0
    %994 = vmatpush1.msra.mxu0 0.0
    %995 = vmatprep.mubr.f32.mxu0 0.0
    %996 = vmatmul.mubr.f32.gmra.mrb[0].mxu0 %v929
    %v997 = vpop.f32.mrb[0].mxu0
    %v998 = vadd.f32 %v926, %v997
    %v999 = vpop.f32.mrb[0].mxu0
    %1000 = vdwg.mxu0
    %1001 = vst [vmem:[#allocation7] sm:$0xff] %v998
    // Predicated region
    $region42: #{tpu_custom_call.1} parent=1 // pred_check
      _
    $region43: #{tpu_custom_call.1} parent=1 // pred_check_branch
      %1003 = sbr.rel (0) target = $region45
    $region44: #{tpu_custom_call.1} parent=1 // pred_region
      %s1005 = ssub.s32 128, 128
      %1006 = vsyncadd [#allocation4], %s1005
      %s1008 = sshll.u32 [#allocation7], 4
      %s1009 = int_to_ptr.vmem [resolvable:$true] %s1008
      %1011 = dma.vmem_to_hbm [thread:$0]  %s1009, 128, %s8, [#allocation4]
    $region45: #{tpu_custom_call.1} parent=1 // pred_fallthru
      _
    // Predicated region
    $region46: #{tpu_custom_call.1} parent=1 // pred_check
      _
    $region47: #{tpu_custom_call.1} parent=1 // pred_check_branch
      %1013 = sbr.rel (0) target = $region49
    $region48: #{tpu_custom_call.1} parent=1 // pred_region
      %1014 = dma.done [#allocation4], 128
    $region49: #{tpu_custom_call.1} parent=1 // pred_fallthru
      _
    %1015 = vsyncpa [#allocation3], 1
    %1016 = vsyncpa [#allocation6], 1
    %1017 = vsyncpa [#allocation4], 1

</llo_original>
